<compile_context>
chip_gen: v5e
topology: v5e:2x2
jax: 0.10.0
libtpu: 0.0.40
codegen_flags: <defaults>
</compile_context>

<pallas_src>
import functools

import jax
import jax.numpy as jnp
from jax.experimental import pallas as pl
from jax.experimental.pallas import tpu as pltpu

LANE = 128  # TPU lane width: batch tiles are multiples of this


def _round_up(v, m):
    return ((v + m - 1) // m) * m


def mlp_kernel(xt_ref, w1t_ref, b1t_ref, w2t_ref, b2t_ref, w3t_ref, b3t_ref, o_ref):
    """One batch tile of y.T = W3.T @ relu(W2.T @ relu(W1.T @ x.T + b1) + b2) + b3."""
    xt = xt_ref[...]          # (2, tm)  f32
    w1t = w1t_ref[...]        # (64, 2)  f32

    # Layer 1 (K=2): two broadcast FMAs on the VPU. x rows broadcast along sublanes
    # (stride-0), w1 columns broadcast along lanes; no MXU / XLU permutes needed.
    h1 = (w1t[:, 0:1] * xt[0:1, :]
          + w1t[:, 1:2] * xt[1:2, :]
          + b1t_ref[...])                                  # (64, tm)
    h1 = jnp.maximum(h1, 0.0)

    mm_dtype = w2t_ref.dtype  # bf16 (default) or f32; accumulation is always f32

    # Layer 2: (128, 64) @ (64, tm) on the MXU.
    h2 = jnp.dot(w2t_ref[...], h1.astype(mm_dtype),
                 preferred_element_type=jnp.float32) + b2t_ref[...]
    h2 = jnp.maximum(h2, 0.0)                              # (128, tm)

    # Layer 3: (2, 128) @ (128, tm) on the MXU, straight into the narrow lane-dense output.
    out = jnp.dot(w3t_ref[...], h2.astype(mm_dtype),
                  preferred_element_type=jnp.float32) + b3t_ref[...]
    o_ref[...] = out.astype(o_ref.dtype)                   # (2, tm)


def prepare_params(params, *, matmul_dtype=jnp.bfloat16):
    """One-time weight prep (call at init, NOT per forward): transpose to the W @ x.T
    layout, reshape biases to column vectors, pre-cast the MXU weights."""
    w1t = jnp.asarray(params["w1"], jnp.float32).T                 # (64, 2)   f32 (VPU layer)
    b1t = jnp.asarray(params["b1"], jnp.float32).reshape(-1, 1)    # (64, 1)
    w2t = jnp.asarray(params["w2"]).T.astype(matmul_dtype)         # (128, 64)
    b2t = jnp.asarray(params["b2"], jnp.float32).reshape(-1, 1)    # (128, 1)
    w3t = jnp.asarray(params["w3"]).T.astype(matmul_dtype)         # (2, 128)
    b3t = jnp.asarray(params["b3"], jnp.float32).reshape(-1, 1)    # (2, 1)
    return (w1t, b1t, w2t, b2t, w3t, b3t)


@functools.partial(jax.jit, static_argnames=("tm",))
def moganet_forward(x, kparams, *, tm=4096):
    """x: (N, 2) float32. kparams: output of prepare_params(). Returns (N, 2) float32."""
    N, din = x.shape
    w1t, b1t, w2t, b2t, w3t, b3t = kparams
    dout = w3t.shape[0]

    # --- tile / grid selection (static under jit) ---
    n_lanes = _round_up(max(N, 1), LANE)
    tm_eff = min(tm, n_lanes)
    if n_lanes >= 2 * LANE:
        # Keep >= 2 grid steps so the "parallel" axis can shard across both v7x TCs.
        tm_eff = min(tm_eff, max(LANE, (n_lanes // 2) // LANE * LANE))
    Np = _round_up(N, tm_eff)
    grid = (Np // tm_eff,)

    # Batch on the lane axis: (N, 2) -> (2, Np), zero-padded ragged tail.
    xt = jnp.pad(x.T, ((0, 0), (0, Np - N)))

    def full_spec(arr):
        # Weights/biases are tiny: replicate the full tensor to every grid step.
        return pl.BlockSpec(arr.shape, lambda i: (0, 0))

    out_t = pl.pallas_call(
        mlp_kernel,
        out_shape=jax.ShapeDtypeStruct((dout, Np), jnp.float32),
        grid_spec=pltpu.PrefetchScalarGridSpec(
            num_scalar_prefetch=0,
            grid=grid,
            in_specs=[
                pl.BlockSpec((din, tm_eff), lambda i: (0, i)),  # x.T tile (2, tm)
                full_spec(w1t), full_spec(b1t),
                full_spec(w2t), full_spec(b2t),
                full_spec(w3t), full_spec(b3t),
            ],
            out_specs=pl.BlockSpec((dout, tm_eff), lambda i: (0, i)),  # (2, tm)
        ),
        compiler_params=pltpu.CompilerParams(
            dimension_semantics=("parallel",),
        ),
    )(xt, w1t, b1t, w2t, b2t, w3t, b3t)

    # Strip lane padding and return to the module's (N, 2) row-major layout.
    return out_t[:, :N].T


def init_params(key):
    """Deterministic init mirroring torch.nn.Linear default (uniform +/- 1/sqrt(fan_in)).
    Weights stored as (in_features, out_features); biases as (1, out_features)."""
    dims = [(2, 64), (64, 128), (128, 2)]
    params = {}
    for idx, (fan_in, fan_out) in enumerate(dims, start=1):
        key, kw, kb = jax.random.split(key, 3)
        bound = 1.0 / jnp.sqrt(jnp.float32(fan_in))
        params[f"w{idx}"] = jax.random.uniform(
            kw, (fan_in, fan_out), jnp.float32, -bound, bound)
        params[f"b{idx}"] = jax.random.uniform(
            kb, (1, fan_out), jnp.float32, -bound, bound)
    return params


def reference_forward(x, params, matmul_dtype=None):
    """Pure-JAX reference. If matmul_dtype is set, round the matmul inputs the same way
    the kernel does (narrow in, f32 accumulate) for a tight apples-to-apples check."""
    def mm(a, b):
        if matmul_dtype is None:
            return jnp.dot(a, b, preferred_element_type=jnp.float32)
        return jnp.dot(a.astype(matmul_dtype), b.astype(matmul_dtype),
                       preferred_element_type=jnp.float32)

    h1 = jnp.maximum(x @ params["w1"] + params["b1"], 0.0)  # layer 1 is f32 in the kernel too
    h2 = jnp.maximum(mm(h1, params["w2"]) + params["b2"], 0.0)
    return mm(h2, params["w3"]) + params["b3"]


if __name__ == "__main__":
    params = init_params(jax.random.PRNGKey(0))
    kparams_bf16 = prepare_params(params, matmul_dtype=jnp.bfloat16)  # fast MXU path
    kparams_f32 = prepare_params(params, matmul_dtype=jnp.float32)    # exact-precision path

    # Small batch of 2-feature inputs, consistent with nn.Linear(2, ...).
    key, kx = jax.random.split(jax.random.PRNGKey(0))
    N = 8
    x = jax.random.normal(kx, (N, 2), jnp.float32)

    out = jax.block_until_ready(moganet_forward(x, kparams_bf16))
    assert out.shape == (N, 2)
    # Tight check vs a reference using the same bf16-input / f32-accumulate matmuls.
    ref_match = reference_forward(x, params, matmul_dtype=jnp.bfloat16)
    assert jnp.allclose(out, ref_match, atol=1e-4, rtol=1e-4), "mismatch vs matched reference"
    # Loose sanity vs the pure-f32 PyTorch-equivalent reference (bf16 matmul inputs).
    ref_f32 = reference_forward(x, params)
    assert jnp.allclose(out, ref_f32, atol=2e-2, rtol=2e-2), "mismatch vs f32 reference"

    # Ragged, larger batch: exercises tiling/padding and the multi-step grid.
    N2 = 1000  # not a multiple of the tile
    x2 = jax.random.normal(jax.random.PRNGKey(7), (N2, 2), jnp.float32)

    # Exact-precision (f32-matmul) path vs the pure-f32 reference.
    out2_f32 = jax.block_until_ready(moganet_forward(x2, kparams_f32))
    ref2 = reference_forward(x2, params)
    assert out2_f32.shape == (N2, 2)
    assert jnp.allclose(out2_f32, ref2, atol=1e-4, rtol=1e-4), "ragged-batch f32 mismatch"

    # bf16 path at the same ragged batch vs the matched-rounding reference.
    out2 = jax.block_until_ready(moganet_forward(x2, kparams_bf16))
    ref2_match = reference_forward(x2, params, matmul_dtype=jnp.bfloat16)
    assert jnp.allclose(out2, ref2_match, atol=1e-4, rtol=1e-4), "ragged-batch bf16 mismatch"

    print("KERNEL_OK")
</pallas_src>

<mosaic_0001>
module attributes {stable_mosaic.version = 11 : i64} {
  func.func @mlp_kernel(%arg0: i32, %arg1: memref<2x128xf32, #tpu.memory_space<vmem>>, %arg2: memref<64x2xf32, #tpu.memory_space<vmem>>, %arg3: memref<64x1xf32, #tpu.memory_space<vmem>>, %arg4: memref<128x64xbf16, #tpu.memory_space<vmem>>, %arg5: memref<128x1xf32, #tpu.memory_space<vmem>>, %arg6: memref<2x128xbf16, #tpu.memory_space<vmem>>, %arg7: memref<2x1xf32, #tpu.memory_space<vmem>>, %arg8: memref<2x128xf32, #tpu.memory_space<vmem>>) attributes {dimension_semantics = [#tpu.dimension_semantics<parallel>], iteration_bounds = array<i64: 1>, scalar_prefetch = 0 : i64, scratch_operands = 0 : i64, tpu.core_type = #tpu.core_type<tc>, window_params = [{transform_indices = @transform_0, window_bounds = array<i64: 2, 128>}, {pipeline_mode = #tpu.pipeline_mode<synchronous>, transform_indices = @transform_1, window_bounds = array<i64: 64, 2>}, {pipeline_mode = #tpu.pipeline_mode<synchronous>, transform_indices = @transform_2, window_bounds = array<i64: 64, 1>}, {pipeline_mode = #tpu.pipeline_mode<synchronous>, transform_indices = @transform_3, window_bounds = array<i64: 128, 64>}, {pipeline_mode = #tpu.pipeline_mode<synchronous>, transform_indices = @transform_4, window_bounds = array<i64: 128, 1>}, {pipeline_mode = #tpu.pipeline_mode<synchronous>, transform_indices = @transform_5, window_bounds = array<i64: 2, 128>}, {pipeline_mode = #tpu.pipeline_mode<synchronous>, transform_indices = @transform_6, window_bounds = array<i64: 2, 1>}, {transform_indices = @transform_7, window_bounds = array<i64: 2, 128>}]} {
    %c0 = arith.constant 0 : index
    %c0_0 = arith.constant 0 : index
    %0 = vector.load %arg1[%c0, %c0_0] : memref<2x128xf32, #tpu.memory_space<vmem>>, vector<2x128xf32>
    %c0_1 = arith.constant 0 : index
    %c0_2 = arith.constant 0 : index
    %1 = vector.load %arg2[%c0_1, %c0_2] : memref<64x2xf32, #tpu.memory_space<vmem>>, vector<64x2xf32>
    %2 = vector.extract_strided_slice %1 {offsets = [0, 0], sizes = [64, 1], strides = [1, 1]} : vector<64x2xf32> to vector<64x1xf32>
    %3 = vector.extract_strided_slice %0 {offsets = [0, 0], sizes = [1, 128], strides = [1, 1]} : vector<2x128xf32> to vector<1x128xf32>
    %4 = vector.broadcast %2 : vector<64x1xf32> to vector<64x128xf32>
    %5 = vector.broadcast %3 : vector<1x128xf32> to vector<64x128xf32>
    %6 = arith.mulf %4, %5 : vector<64x128xf32>
    %7 = vector.extract_strided_slice %1 {offsets = [0, 1], sizes = [64, 1], strides = [1, 1]} : vector<64x2xf32> to vector<64x1xf32>
    %8 = vector.extract_strided_slice %0 {offsets = [1, 0], sizes = [1, 128], strides = [1, 1]} : vector<2x128xf32> to vector<1x128xf32>
    %9 = vector.broadcast %7 : vector<64x1xf32> to vector<64x128xf32>
    %10 = vector.broadcast %8 : vector<1x128xf32> to vector<64x128xf32>
    %11 = arith.mulf %9, %10 : vector<64x128xf32>
    %12 = arith.addf %6, %11 : vector<64x128xf32>
    %c0_3 = arith.constant 0 : index
    %c0_4 = arith.constant 0 : index
    %13 = vector.load %arg3[%c0_3, %c0_4] : memref<64x1xf32, #tpu.memory_space<vmem>>, vector<64x1xf32>
    %14 = vector.broadcast %13 : vector<64x1xf32> to vector<64x128xf32>
    %15 = arith.addf %12, %14 : vector<64x128xf32>
    %cst = arith.constant 0.000000e+00 : f32
    %16 = vector.broadcast %cst : f32 to vector<64x128xf32>
    %17 = arith.maximumf %15, %16 : vector<64x128xf32>
    %c0_5 = arith.constant 0 : index
    %c0_6 = arith.constant 0 : index
    %18 = vector.load %arg4[%c0_5, %c0_6] : memref<128x64xbf16, #tpu.memory_space<vmem>>, vector<128x64xbf16>
    %19 = arith.truncf %17 : vector<64x128xf32> to vector<64x128xbf16>
    %cst_7 = arith.constant dense<0.000000e+00> : vector<128x128xf32>
    %20 = tpu.matmul %18, %19, %cst_7 {dimension_numbers = #tpu.dot_dimension_numbers<[1], [0], [0], [1], [0, 0, 1, 1], [], []>} : vector<128x64xbf16>, vector<64x128xbf16>, vector<128x128xf32> -> vector<128x128xf32>
    %c0_8 = arith.constant 0 : index
    %c0_9 = arith.constant 0 : index
    %21 = vector.load %arg5[%c0_8, %c0_9] : memref<128x1xf32, #tpu.memory_space<vmem>>, vector<128x1xf32>
    %22 = vector.broadcast %21 : vector<128x1xf32> to vector<128x128xf32>
    %23 = arith.addf %20, %22 : vector<128x128xf32>
    %cst_10 = arith.constant 0.000000e+00 : f32
    %24 = vector.broadcast %cst_10 : f32 to vector<128x128xf32>
    %25 = arith.maximumf %23, %24 : vector<128x128xf32>
    %c0_11 = arith.constant 0 : index
    %c0_12 = arith.constant 0 : index
    %26 = vector.load %arg6[%c0_11, %c0_12] : memref<2x128xbf16, #tpu.memory_space<vmem>>, vector<2x128xbf16>
    %27 = arith.truncf %25 : vector<128x128xf32> to vector<128x128xbf16>
    %cst_13 = arith.constant dense<0.000000e+00> : vector<2x128xf32>
    %28 = tpu.matmul %26, %27, %cst_13 {dimension_numbers = #tpu.dot_dimension_numbers<[1], [0], [0], [1], [0, 0, 1, 1], [], []>} : vector<2x128xbf16>, vector<128x128xbf16>, vector<2x128xf32> -> vector<2x128xf32>
    %c0_14 = arith.constant 0 : index
    %c0_15 = arith.constant 0 : index
    %29 = vector.load %arg7[%c0_14, %c0_15] : memref<2x1xf32, #tpu.memory_space<vmem>>, vector<2x1xf32>
    %30 = vector.broadcast %29 : vector<2x1xf32> to vector<2x128xf32>
    %31 = arith.addf %28, %30 : vector<2x128xf32>
    %c0_16 = arith.constant 0 : index
    %c0_17 = arith.constant 0 : index
    %32 = vector.load %arg8[%c0_16, %c0_17] : memref<2x128xf32, #tpu.memory_space<vmem>>, vector<2x128xf32>
    tpu.vector_store %arg8[%c0_16, %c0_17], %31 {strides = array<i32>} : memref<2x128xf32, #tpu.memory_space<vmem>>, vector<2x128xf32>,
    return
  }
  func.func @transform_0(%arg0: i32) -> (i32, i32) {
    %c0_i32 = arith.constant 0 : i32
    %c0_i32_0 = arith.constant 0 : i32
    return %c0_i32, %arg0 : i32, i32
  }
  func.func @transform_1(%arg0: i32) -> (i32, i32) {
    %c0_i32 = arith.constant 0 : i32
    %c0_i32_0 = arith.constant 0 : i32
    %c0_i32_1 = arith.constant 0 : i32
    return %c0_i32, %c0_i32_0 : i32, i32
  }
  func.func @transform_2(%arg0: i32) -> (i32, i32) {
    %c0_i32 = arith.constant 0 : i32
    %c0_i32_0 = arith.constant 0 : i32
    %c0_i32_1 = arith.constant 0 : i32
    return %c0_i32, %c0_i32_0 : i32, i32
  }
  func.func @transform_3(%arg0: i32) -> (i32, i32) {
    %c0_i32 = arith.constant 0 : i32
    %c0_i32_0 = arith.constant 0 : i32
    %c0_i32_1 = arith.constant 0 : i32
    return %c0_i32, %c0_i32_0 : i32, i32
  }
  func.func @transform_4(%arg0: i32) -> (i32, i32) {
    %c0_i32 = arith.constant 0 : i32
    %c0_i32_0 = arith.constant 0 : i32
    %c0_i32_1 = arith.constant 0 : i32
    return %c0_i32, %c0_i32_0 : i32, i32
  }
  func.func @transform_5(%arg0: i32) -> (i32, i32) {
    %c0_i32 = arith.constant 0 : i32
    %c0_i32_0 = arith.constant 0 : i32
    %c0_i32_1 = arith.constant 0 : i32
    return %c0_i32, %c0_i32_0 : i32, i32
  }
  func.func @transform_6(%arg0: i32) -> (i32, i32) {
    %c0_i32 = arith.constant 0 : i32
    %c0_i32_0 = arith.constant 0 : i32
    %c0_i32_1 = arith.constant 0 : i32
    return %c0_i32, %c0_i32_0 : i32, i32
  }
  func.func @transform_7(%arg0: i32) -> (i32, i32) {
    %c0_i32 = arith.constant 0 : i32
    %c0_i32_0 = arith.constant 0 : i32
    return %c0_i32, %arg0 : i32, i32
  }
}

</mosaic_0001>

<llo_original>
// kernel: moganet_forward.1
$region0: #{moganet_forward.1}
  #allocation0 [shape = 'u32[]', space=smem, size = 0x4, offset = 0x4, fixed_abs, tag = 'smem constant byte address 0x4 - core index']
  #allocation1 [shape = 'u32[72,128]{1,0:T(1,128)}', space=vmem, size = 0x9000, scoped, tag = 'internal scratch']
  %s0 = inlined_call_operand.vmem [shape: f32[2,128], index: 0, kind: input, shape index: {}]
  %s1 = inlined_call_operand.vmem [shape: f32[64,2], index: 1, kind: input, shape index: {}]
  %s2 = inlined_call_operand.vmem [shape: f32[64,1], index: 2, kind: input, shape index: {}]
  %s3 = inlined_call_operand.vmem [shape: bf16[128,64], index: 3, kind: input, shape index: {}]
  %s4 = inlined_call_operand.vmem [shape: f32[128,1], index: 4, kind: input, shape index: {}]
  %s5 = inlined_call_operand.vmem [shape: bf16[2,128], index: 5, kind: input, shape index: {}]
  %s6 = inlined_call_operand.vmem [shape: f32[2,1], index: 6, kind: input, shape index: {}]
  %s7 = inlined_call_operand.vmem [shape: f32[2,128], index: 7, kind: output, shape index: {}]
  %s8 = sld [smem:[#allocation0]]
  $region38: #{moganet_forward.1} parent=0
    _
  %s10 = ssub.s32 1, %s8
  %s11 = scalar_select 0, %s10, %s8
  // Predicated region
  $region2: #{moganet_forward.1} parent=0 // pred_check
    _
  $region3: #{moganet_forward.1} parent=0 // pred_check_branch
    %13 = sbr.rel (0) target = $region5
  $region4: #{moganet_forward.1} parent=0 // pred_region
    _
  $region5: #{moganet_forward.1} parent=0 // pred_fallthru
    _
  // Predicated region
  $region6: #{moganet_forward.1} parent=0 // pred_check
    _
  $region7: #{moganet_forward.1} parent=0 // pred_check_branch
    %15 = sbr.rel (0) target = $region9
  $region8: #{moganet_forward.1} parent=0 // pred_region
    _
  $region9: #{moganet_forward.1} parent=0 // pred_fallthru
    _
  // Predicated region
  $region10: #{moganet_forward.1} parent=0 // pred_check
    _
  $region11: #{moganet_forward.1} parent=0 // pred_check_branch
    %17 = sbr.rel (0) target = $region13
  $region12: #{moganet_forward.1} parent=0 // pred_region
    _
  $region13: #{moganet_forward.1} parent=0 // pred_fallthru
    _
  // Predicated region
  $region14: #{moganet_forward.1} parent=0 // pred_check
    _
  $region15: #{moganet_forward.1} parent=0 // pred_check_branch
    %19 = sbr.rel (0) target = $region17
  $region16: #{moganet_forward.1} parent=0 // pred_region
    _
  $region17: #{moganet_forward.1} parent=0 // pred_fallthru
    _
  // Predicated region
  $region18: #{moganet_forward.1} parent=0 // pred_check
    _
  $region19: #{moganet_forward.1} parent=0 // pred_check_branch
    %21 = sbr.rel (0) target = $region21
  $region20: #{moganet_forward.1} parent=0 // pred_region
    _
  $region21: #{moganet_forward.1} parent=0 // pred_fallthru
    _
  // Predicated region
  $region22: #{moganet_forward.1} parent=0 // pred_check
    _
  $region23: #{moganet_forward.1} parent=0 // pred_check_branch
    %23 = sbr.rel (0) target = $region25
  $region24: #{moganet_forward.1} parent=0 // pred_region
    _
  $region25: #{moganet_forward.1} parent=0 // pred_fallthru
    _
  // Predicated region
  $region26: #{moganet_forward.1} parent=0 // pred_check
    _
  $region27: #{moganet_forward.1} parent=0 // pred_check_branch
    %25 = sbr.rel (0) target = $region29
  $region28: #{moganet_forward.1} parent=0 // pred_region
    _
  $region29: #{moganet_forward.1} parent=0 // pred_fallthru
    _
  %v27 = vld [vmem:[%s0] sm:$0x3]
  %v28 = vld [vmem:[%s1] sm:$0xff]
  %v29 = vld [vmem:[%s1 + $0x8] sm:$0xff]
  %v30 = vld [vmem:[%s1 + $0x10] sm:$0xff]
  %v31 = vld [vmem:[%s1 + $0x18] sm:$0xff]
  %v32 = vld [vmem:[%s1 + $0x20] sm:$0xff]
  %v33 = vld [vmem:[%s1 + $0x28] sm:$0xff]
  %v34 = vld [vmem:[%s1 + $0x30] sm:$0xff]
  %v35 = vld [vmem:[%s1 + $0x38] sm:$0xff]
  %37 = vset.pattern.permute.xlu0 0
  %38 = vperm.xlu0 %37, %v28
  %v39 = vpop.permute.xlu0 %38
  %42 = vset.pattern.permute.xlu0 0
  %43 = vperm.xlu0 %42, %v29
  %v44 = vpop.permute.xlu0 %43
  %47 = vset.pattern.permute.xlu0 0
  %48 = vperm.xlu0 %47, %v30
  %v49 = vpop.permute.xlu0 %48
  %52 = vset.pattern.permute.xlu0 0
  %53 = vperm.xlu0 %52, %v31
  %v54 = vpop.permute.xlu0 %53
  %57 = vset.pattern.permute.xlu0 0
  %58 = vperm.xlu0 %57, %v32
  %v59 = vpop.permute.xlu0 %58
  %62 = vset.pattern.permute.xlu0 0
  %63 = vperm.xlu0 %62, %v33
  %v64 = vpop.permute.xlu0 %63
  %67 = vset.pattern.permute.xlu0 0
  %68 = vperm.xlu0 %67, %v34
  %v69 = vpop.permute.xlu0 %68
  %72 = vset.pattern.permute.xlu0 0
  %73 = vperm.xlu0 %72, %v35
  %v74 = vpop.permute.xlu0 %73
  %v76 = vperm.slane %v27, 0
  %v77 = vmul.f32 %v39, %v76
  %v78 = vmul.f32 %v44, %v76
  %v79 = vmul.f32 %v49, %v76
  %v80 = vmul.f32 %v54, %v76
  %v81 = vmul.f32 %v59, %v76
  %v82 = vmul.f32 %v64, %v76
  %v83 = vmul.f32 %v69, %v76
  %v84 = vmul.f32 %v74, %v76
  %85 = vset.pattern.permute.xlu0 1
  %86 = vperm.xlu0 %85, %v28
  %v87 = vpop.permute.xlu0 %86
  %89 = vset.pattern.permute.xlu0 1
  %90 = vperm.xlu0 %89, %v29
  %v91 = vpop.permute.xlu0 %90
  %93 = vset.pattern.permute.xlu0 1
  %94 = vperm.xlu0 %93, %v30
  %v95 = vpop.permute.xlu0 %94
  %97 = vset.pattern.permute.xlu0 1
  %98 = vperm.xlu0 %97, %v31
  %v99 = vpop.permute.xlu0 %98
  %101 = vset.pattern.permute.xlu0 1
  %102 = vperm.xlu0 %101, %v32
  %v103 = vpop.permute.xlu0 %102
  %105 = vset.pattern.permute.xlu0 1
  %106 = vperm.xlu0 %105, %v33
  %v107 = vpop.permute.xlu0 %106
  %109 = vset.pattern.permute.xlu0 1
  %110 = vperm.xlu0 %109, %v34
  %v111 = vpop.permute.xlu0 %110
  %113 = vset.pattern.permute.xlu0 1
  %114 = vperm.xlu0 %113, %v35
  %v115 = vpop.permute.xlu0 %114
  %v117 = vperm.slane %v27, 1
  %v118 = vmul.f32 %v87, %v117
  %v119 = vmul.f32 %v91, %v117
  %v120 = vmul.f32 %v95, %v117
  %v121 = vmul.f32 %v99, %v117
  %v122 = vmul.f32 %v103, %v117
  %v123 = vmul.f32 %v107, %v117
  %v124 = vmul.f32 %v111, %v117
  %v125 = vmul.f32 %v115, %v117
  %v126 = vadd.f32 %v77, %v118
  %v127 = vadd.f32 %v78, %v119
  %v128 = vadd.f32 %v79, %v120
  %v129 = vadd.f32 %v80, %v121
  %v130 = vadd.f32 %v81, %v122
  %v131 = vadd.f32 %v82, %v123
  %v132 = vadd.f32 %v83, %v124
  %v133 = vadd.f32 %v84, %v125
  %v134 = vld [vmem:[%s2] sm:$0xff]
  %v135 = vld [vmem:[%s2 + $0x8] sm:$0xff]
  %v136 = vld [vmem:[%s2 + $0x10] sm:$0xff]
  %v137 = vld [vmem:[%s2 + $0x18] sm:$0xff]
  %v138 = vld [vmem:[%s2 + $0x20] sm:$0xff]
  %v139 = vld [vmem:[%s2 + $0x28] sm:$0xff]
  %v140 = vld [vmem:[%s2 + $0x30] sm:$0xff]
  %v141 = vld [vmem:[%s2 + $0x38] sm:$0xff]
  %143 = vset.pattern.permute.xlu0 0
  %144 = vperm.xlu0 %143, %v134
  %v145 = vpop.permute.xlu0 %144
  %148 = vset.pattern.permute.xlu0 0
  %149 = vperm.xlu0 %148, %v135
  %v150 = vpop.permute.xlu0 %149
  %153 = vset.pattern.permute.xlu0 0
  %154 = vperm.xlu0 %153, %v136
  %v155 = vpop.permute.xlu0 %154
  %158 = vset.pattern.permute.xlu0 0
  %159 = vperm.xlu0 %158, %v137
  %v160 = vpop.permute.xlu0 %159
  %163 = vset.pattern.permute.xlu0 0
  %164 = vperm.xlu0 %163, %v138
  %v165 = vpop.permute.xlu0 %164
  %168 = vset.pattern.permute.xlu0 0
  %169 = vperm.xlu0 %168, %v139
  %v170 = vpop.permute.xlu0 %169
  %173 = vset.pattern.permute.xlu0 0
  %174 = vperm.xlu0 %173, %v140
  %v175 = vpop.permute.xlu0 %174
  %178 = vset.pattern.permute.xlu0 0
  %179 = vperm.xlu0 %178, %v141
  %v180 = vpop.permute.xlu0 %179
  %v182 = vadd.f32 %v126, %v145
  %v183 = vadd.f32 %v127, %v150
  %v184 = vadd.f32 %v128, %v155
  %v185 = vadd.f32 %v129, %v160
  %v186 = vadd.f32 %v130, %v165
  %v187 = vadd.f32 %v131, %v170
  %v188 = vadd.f32 %v132, %v175
  %v189 = vadd.f32 %v133, %v180
  %v190 = vmax.f32 %v182, 0.0
  %v191 = vmax.f32 %v183, 0.0
  %v192 = vmax.f32 %v184, 0.0
  %v193 = vmax.f32 %v185, 0.0
  %v194 = vmax.f32 %v186, 0.0
  %v195 = vmax.f32 %v187, 0.0
  %v196 = vmax.f32 %v188, 0.0
  %v197 = vmax.f32 %v189, 0.0
  %v198 = vld [vmem:[%s3] sm:$0xf]
  %v199 = vld [vmem:[%s3 + $0x4] sm:$0xf]
  %v200 = vld [vmem:[%s3 + $0x8] sm:$0xf]
  %v201 = vld [vmem:[%s3 + $0xc] sm:$0xf]
  %v202 = vld [vmem:[%s3 + $0x10] sm:$0xf]
  %v203 = vld [vmem:[%s3 + $0x14] sm:$0xf]
  %v204 = vld [vmem:[%s3 + $0x18] sm:$0xf]
  %v205 = vld [vmem:[%s3 + $0x1c] sm:$0xf]
  %v206 = vld [vmem:[%s3 + $0x20] sm:$0xf]
  %v207 = vld [vmem:[%s3 + $0x24] sm:$0xf]
  %v208 = vld [vmem:[%s3 + $0x28] sm:$0xf]
  %v209 = vld [vmem:[%s3 + $0x2c] sm:$0xf]
  %v210 = vld [vmem:[%s3 + $0x30] sm:$0xf]
  %v211 = vld [vmem:[%s3 + $0x34] sm:$0xf]
  %v212 = vld [vmem:[%s3 + $0x38] sm:$0xf]
  %v213 = vld [vmem:[%s3 + $0x3c] sm:$0xf]
  %v214 = vpack.c.bf16 %v191, %v190
  %v215 = vpack.c.bf16 %v193, %v192
  %v216 = vpack.c.bf16 %v195, %v194
  %v217 = vpack.c.bf16 %v197, %v196
  %v218 = vld [vmem:[%s4] sm:$0xff]
  %v219 = vld [vmem:[%s4 + $0x8] sm:$0xff]
  %v220 = vld [vmem:[%s4 + $0x10] sm:$0xff]
  %v221 = vld [vmem:[%s4 + $0x18] sm:$0xff]
  %v222 = vld [vmem:[%s4 + $0x20] sm:$0xff]
  %v223 = vld [vmem:[%s4 + $0x28] sm:$0xff]
  %v224 = vld [vmem:[%s4 + $0x30] sm:$0xff]
  %v225 = vld [vmem:[%s4 + $0x38] sm:$0xff]
  %v226 = vld [vmem:[%s4 + $0x40] sm:$0xff]
  %v227 = vld [vmem:[%s4 + $0x48] sm:$0xff]
  %v228 = vld [vmem:[%s4 + $0x50] sm:$0xff]
  %v229 = vld [vmem:[%s4 + $0x58] sm:$0xff]
  %v230 = vld [vmem:[%s4 + $0x60] sm:$0xff]
  %v231 = vld [vmem:[%s4 + $0x68] sm:$0xff]
  %v232 = vld [vmem:[%s4 + $0x70] sm:$0xff]
  %v233 = vld [vmem:[%s4 + $0x78] sm:$0xff]
  %235 = vset.pattern.permute.xlu0 0
  %236 = vperm.xlu0 %235, %v218
  %v237 = vpop.permute.xlu0 %236
  %240 = vset.pattern.permute.xlu0 0
  %241 = vperm.xlu0 %240, %v219
  %v242 = vpop.permute.xlu0 %241
  %245 = vset.pattern.permute.xlu0 0
  %246 = vperm.xlu0 %245, %v220
  %v247 = vpop.permute.xlu0 %246
  %250 = vset.pattern.permute.xlu0 0
  %251 = vperm.xlu0 %250, %v221
  %v252 = vpop.permute.xlu0 %251
  %255 = vset.pattern.permute.xlu0 0
  %256 = vperm.xlu0 %255, %v222
  %v257 = vpop.permute.xlu0 %256
  %260 = vset.pattern.permute.xlu0 0
  %261 = vperm.xlu0 %260, %v223
  %v262 = vpop.permute.xlu0 %261
  %265 = vset.pattern.permute.xlu0 0
  %266 = vperm.xlu0 %265, %v224
  %v267 = vpop.permute.xlu0 %266
  %270 = vset.pattern.permute.xlu0 0
  %271 = vperm.xlu0 %270, %v225
  %v272 = vpop.permute.xlu0 %271
  %275 = vset.pattern.permute.xlu0 0
  %276 = vperm.xlu0 %275, %v226
  %v277 = vpop.permute.xlu0 %276
  %280 = vset.pattern.permute.xlu0 0
  %281 = vperm.xlu0 %280, %v227
  %v282 = vpop.permute.xlu0 %281
  %285 = vset.pattern.permute.xlu0 0
  %286 = vperm.xlu0 %285, %v228
  %v287 = vpop.permute.xlu0 %286
  %290 = vset.pattern.permute.xlu0 0
  %291 = vperm.xlu0 %290, %v229
  %v292 = vpop.permute.xlu0 %291
  %295 = vset.pattern.permute.xlu0 0
  %296 = vperm.xlu0 %295, %v230
  %v297 = vpop.permute.xlu0 %296
  %300 = vset.pattern.permute.xlu0 0
  %301 = vperm.xlu0 %300, %v231
  %v302 = vpop.permute.xlu0 %301
  %305 = vset.pattern.permute.xlu0 0
  %306 = vperm.xlu0 %305, %v232
  %v307 = vpop.permute.xlu0 %306
  %310 = vset.pattern.permute.xlu0 0
  %311 = vperm.xlu0 %310, %v233
  %v312 = vpop.permute.xlu0 %311
  %v330 = vunpack.c.l.b16 %v198
  %v331 = vunpack.c.l.b16 %v199
  %v332 = vunpack.c.l.b16 %v200
  %v333 = vunpack.c.l.b16 %v201
  %v334 = vunpack.c.l.b16 %v202
  %v335 = vunpack.c.l.b16 %v203
  %v336 = vunpack.c.l.b16 %v204
  %v337 = vunpack.c.l.b16 %v205
  %v338 = vunpack.c.l.b16 %v206
  %v339 = vunpack.c.l.b16 %v207
  %v340 = vunpack.c.l.b16 %v208
  %v341 = vunpack.c.l.b16 %v209
  %v342 = vunpack.c.l.b16 %v210
  %v343 = vunpack.c.l.b16 %v211
  %v344 = vunpack.c.l.b16 %v212
  %v345 = vunpack.c.l.b16 %v213
  %v346 = vpack.c.b16 %v331, %v330
  %v347 = vpack.c.b16 %v333, %v332
  %v348 = vpack.c.b16 %v335, %v334
  %v349 = vpack.c.b16 %v337, %v336
  %v350 = vpack.c.b16 %v339, %v338
  %v351 = vpack.c.b16 %v341, %v340
  %v352 = vpack.c.b16 %v343, %v342
  %v353 = vpack.c.b16 %v345, %v344
  %vm354 = vcmask 523264
  %v356 = vsel %vm354, %v346, 0
  %v359 = vsel %vm354, %v347, 0
  %v362 = vsel %vm354, %v348, 0
  %v365 = vsel %vm354, %v349, 0
  %v368 = vsel %vm354, %v350, 0
  %v371 = vsel %vm354, %v351, 0
  %v374 = vsel %vm354, %v352, 0
  %v377 = vsel %vm354, %v353, 0
  %379 = vmatpush.bf16.msra.mxu0 0
  %380 = vmatpush.bf16.msra.mxu0 0
  %381 = vmatpush.bf16.msra.mxu0 0
  %382 = vmatpush.bf16.msra.mxu0 0
  %383 = vmatpush.bf16.msra.mxu0 %v217
  %384 = vmatpush.bf16.msra.mxu0 %v216
  %385 = vmatpush.bf16.msra.mxu0 %v215
  %386 = vmatpush.bf16.msra.mxu0 %v214
  %387 = vmatmul.bf16.gmra.mxu0 %v356
  %v388 = vpop.f32.mrf.mxu0
  %v389 = vadd.f32 %v237, %v388
  %v390 = vpop.f32.mrf.mxu0
  %v391 = vadd.f32 %v242, %v390
  %392 = vmatmul.bf16.gmra.mxu0 %v359
  %v393 = vpop.f32.mrf.mxu0
  %v394 = vadd.f32 %v247, %v393
  %v395 = vpop.f32.mrf.mxu0
  %v396 = vadd.f32 %v252, %v395
  %397 = vmatmul.bf16.gmra.mxu0 %v362
  %v398 = vpop.f32.mrf.mxu0
  %v399 = vadd.f32 %v257, %v398
  %v400 = vpop.f32.mrf.mxu0
  %v401 = vadd.f32 %v262, %v400
  %402 = vmatmul.bf16.gmra.mxu0 %v365
  %v403 = vpop.f32.mrf.mxu0
  %v404 = vadd.f32 %v267, %v403
  %v405 = vpop.f32.mrf.mxu0
  %v406 = vadd.f32 %v272, %v405
  %407 = vmatmul.bf16.gmra.mxu0 %v368
  %v408 = vpop.f32.mrf.mxu0
  %v409 = vadd.f32 %v277, %v408
  %v410 = vpop.f32.mrf.mxu0
  %v411 = vadd.f32 %v282, %v410
  %412 = vmatmul.bf16.gmra.mxu0 %v371
  %v413 = vpop.f32.mrf.mxu0
  %v414 = vadd.f32 %v287, %v413
  %v415 = vpop.f32.mrf.mxu0
  %v416 = vadd.f32 %v292, %v415
  %417 = vmatmul.bf16.gmra.mxu0 %v374
  %v418 = vpop.f32.mrf.mxu0
  %v419 = vadd.f32 %v297, %v418
  %v420 = vpop.f32.mrf.mxu0
  %v421 = vadd.f32 %v302, %v420
  %422 = vmatmul.bf16.gmra.mxu0 %v377
  %v423 = vpop.f32.mrf.mxu0
  %v424 = vadd.f32 %v307, %v423
  %v425 = vpop.f32.mrf.mxu0
  %v426 = vadd.f32 %v312, %v425
  %427 = vdwg.mxu0
  %v428 = vmax.f32 %v389, 0.0
  %v429 = vmax.f32 %v391, 0.0
  %v430 = vmax.f32 %v394, 0.0
  %v431 = vmax.f32 %v396, 0.0
  %v432 = vmax.f32 %v399, 0.0
  %v433 = vmax.f32 %v401, 0.0
  %v434 = vmax.f32 %v404, 0.0
  %v435 = vmax.f32 %v406, 0.0
  %v436 = vmax.f32 %v409, 0.0
  %v437 = vmax.f32 %v411, 0.0
  %v438 = vmax.f32 %v414, 0.0
  %v439 = vmax.f32 %v416, 0.0
  %v440 = vmax.f32 %v419, 0.0
  %v441 = vmax.f32 %v421, 0.0
  %v442 = vmax.f32 %v424, 0.0
  %v443 = vmax.f32 %v426, 0.0
  %v444 = vld [vmem:[%s5] sm:$0x1]
  %v445 = vpack.c.bf16 %v429, %v428
  %v446 = vpack.c.bf16 %v431, %v430
  %v447 = vpack.c.bf16 %v433, %v432
  %v448 = vpack.c.bf16 %v435, %v434
  %v449 = vpack.c.bf16 %v437, %v436
  %v450 = vpack.c.bf16 %v439, %v438
  %v451 = vpack.c.bf16 %v441, %v440
  %v452 = vpack.c.bf16 %v443, %v442
  %v453 = vld [vmem:[%s6] sm:$0x3]
  %455 = vset.pattern.permute.xlu0 0
  %456 = vperm.xlu0 %455, %v453
  %v457 = vpop.permute.xlu0 %456
  %459 = vmatpush.bf16.msra.mxu0 %v452
  %460 = vmatpush.bf16.msra.mxu0 %v451
  %461 = vmatpush.bf16.msra.mxu0 %v450
  %462 = vmatpush.bf16.msra.mxu0 %v449
  %463 = vmatpush.bf16.msra.mxu0 %v448
  %464 = vmatpush.bf16.msra.mxu0 %v447
  %465 = vmatpush.bf16.msra.mxu0 %v446
  %466 = vmatpush.bf16.msra.mxu0 %v445
  %467 = vmatmul.bf16.gmra.mxu0 %v444
  %v468 = vpop.f32.mrf.mxu0
  %v469 = vadd.f32 %v457, %v468
  %v470 = vpop.f32.mrf.mxu0
  %471 = vdwg.mxu0
  %472 = vst [vmem:[%s7] sm:$0x3] %v469
  // Predicated region
  $region30: #{moganet_forward.1} parent=0 // pred_check
    _
  $region31: #{moganet_forward.1} parent=0 // pred_check_branch
    %474 = sbr.rel (0) target = $region33
  $region32: #{moganet_forward.1} parent=0 // pred_region
    _
  $region33: #{moganet_forward.1} parent=0 // pred_fallthru
    _
  // Predicated region
  $region34: #{moganet_forward.1} parent=0 // pred_check
    _
  $region35: #{moganet_forward.1} parent=0 // pred_check_branch
    %476 = sbr.rel (0) target = $region37
  $region36: #{moganet_forward.1} parent=0 // pred_region
    _
  $region37: #{moganet_forward.1} parent=0 // pred_fallthru
    _

</llo_original>
